<compile_context>
chip_gen: v5e
topology: v5e:2x2
jax: 0.10.0
libtpu: 0.0.40
codegen_flags: <defaults>
</compile_context>

<pallas_src>
import math
from typing import NamedTuple

import jax
import jax.numpy as jnp
from jax.experimental import pallas as pl
from jax.experimental.pallas import tpu as pltpu


# ----------------------------- kernel --------------------------------------

def _row_parallel_matmul_kernel(x_ref, w_ref, b_ref, o_ref, acc_ref):
    """x_ref: (tm, tk)  w_ref: (tk, tn)  b_ref: (1, tn)  o_ref: (tm, tn)."""
    k = pl.program_id(2)

    @pl.when(k == 0)
    def _():
        acc_ref[...] = jnp.zeros_like(acc_ref)

    # Plain (tm,tk)@(tk,tn) contraction: weights were pre-transposed in the
    # (hoisted) prep step, so no XLU transpose is paid per grid step.
    acc_ref[...] += jnp.dot(x_ref[...], w_ref[...],
                            preferred_element_type=jnp.float32)

    @pl.when(k == pl.num_programs(2) - 1)
    def _():
        # Bias touched only in the epilogue (its BlockSpec is K-invariant, so
        # the tile stays resident across the K loop).
        o_ref[...] = (acc_ref[...] + b_ref[...]).astype(o_ref.dtype)


# ----------------------------- tiling plan ----------------------------------

_TM_CANDIDATES = (1024, 768, 512, 384, 256, 128)
_TN_CANDIDATES = (512, 384, 256, 128)
_TK_CANDIDATES = (2048, 1536, 1024, 768, 512, 384, 256, 128)

# Working-set budget for the double-buffered pipeline. Chosen to fit v7x's
# 64 MiB *physical* VMEM with headroom (v5e/v6e have 128 MiB physical).
_VMEM_BUDGET = 40 * 1024 * 1024
_MAX_PAD_FRAC = 0.125


def _choose_tile(dim, candidates):
    """Pick (tile, padded_extent): prefer the largest MXU-aligned candidate
    whose zero-padding waste is <= ~12.5%; fall back to least absolute pad."""
    if dim <= candidates[-1]:
        return dim, dim                     # full-extent block (always legal)
    fallback = None
    for t in candidates:                    # descending
        if t > dim:
            continue
        padded = -(-dim // t) * t
        if (padded - dim) / dim <= _MAX_PAD_FRAC:
            return t, padded
        if fallback is None or padded < fallback[1]:
            fallback = (t, padded)
    return fallback


def _vmem_bytes(tm, tn, tk, in_itemsize, out_itemsize):
    """Double-buffered x/w/out + f32 accumulator + bias working set."""
    return (2 * tm * tk * in_itemsize       # activations (double-buffered)
            + 2 * tk * tn * in_itemsize     # weights     (double-buffered)
            + 2 * tm * tn * out_itemsize    # output      (double-buffered)
            + tm * tn * 4                   # f32 accumulator scratch
            + 2 * tn * 4)                   # bias


def _plan_nk(N, K, *, in_itemsize, tm_ref, enforce_two_n_blocks):
    tn, Np = _choose_tile(N, _TN_CANDIDATES)
    if enforce_two_n_blocks and N >= 256 and Np // tn < 2:
        # Small-M shapes: keep >=2 blocks on a "parallel" axis so both of
        # v7x's TensorCores get work.
        cand = tuple(t for t in _TN_CANDIDATES if t <= Np // 2) or (_TN_CANDIDATES[-1],)
        tn, Np = _choose_tile(N, cand)
    tk, Kp = _choose_tile(K, _TK_CANDIDATES)
    # Keep the working set inside the cross-generation VMEM budget by
    # shrinking the K tile first (tk does not change HBM traffic).
    while (_vmem_bytes(tm_ref, tn, tk, in_itemsize, 4) > _VMEM_BUDGET
           and tk > _TK_CANDIDATES[-1]):
        smaller = [t for t in _TK_CANDIDATES if t < tk]
        if not smaller:
            break
        tk = smaller[0]
        Kp = -(-K // tk) * tk
    return tn, Np, tk, Kp


# ----------------------------- parameter prep (hoisted) ---------------------

class RowParallelParams(NamedTuple):
    """Pre-laid-out parameters: compute ONCE per weight update, reuse per step."""
    w_kt: jax.Array   # (Kp, Np) = concat_i(W_i^T, axis=0), padded, compute dtype
    b_sum: jax.Array  # (1, Np)  = sum_i b_i, f32, padded
    n: int            # logical out_features
    k: int            # logical in_features (full, unsharded)
    tn: int
    tk: int


def prepare_row_parallel_params(weights, biases, *, compute_dtype=jnp.bfloat16,
                                m_hint=None):
    """One-time layout plumbing hoisted out of the forward pass.

    weights: (P, out_features, in_features // P); biases: (P, out_features).
    m_hint: expected number of tokens (rows of X) per forward; only used to
    decide the N tiling so v7x's two TensorCores both get work when the M grid
    collapses to a single block (decode-style shapes).
    """
    P, N, K_per = weights.shape
    K = P * K_per
    in_isz = jnp.dtype(compute_dtype).itemsize

    if m_hint is None:
        tm_ref, enforce = _TM_CANDIDATES[0], False
    else:
        tm_ref, mp_ref = _choose_tile(int(m_hint), _TM_CANDIDATES)
        enforce = (mp_ref // tm_ref) == 1

    tn, Np, tk, Kp = _plan_nk(N, K, in_itemsize=in_isz, tm_ref=tm_ref,
                              enforce_two_n_blocks=enforce)

    # sum_i X_i @ W_i^T == X @ concat_i(W_i^T, axis=0)
    w_kt = jnp.transpose(weights, (0, 2, 1)).reshape(K, N).astype(compute_dtype)
    # forward() adds the *full* bias on every rank before the all-reduce, so
    # the reduced output carries sum_i b_i (matches module + _reference).
    b_sum = jnp.sum(biases.astype(jnp.float32), axis=0).reshape(1, N)
    if (Kp, Np) != (K, N):
        w_kt = jnp.pad(w_kt, ((0, Kp - K), (0, Np - N)))
    if Np != N:
        b_sum = jnp.pad(b_sum, ((0, 0), (0, Np - N)))
    return RowParallelParams(w_kt=w_kt, b_sum=b_sum, n=N, k=K, tn=tn, tk=tk)


# ----------------------------- forward --------------------------------------

def row_parallel_linear(x, params: RowParallelParams, *, out_dtype=None):
    """x: (..., in_features) -> (..., out_features). Uses pre-laid-out params."""
    lead = x.shape[:-1]
    M = math.prod(lead) if lead else 1
    N, K = params.n, params.k
    assert x.shape[-1] == K, (x.shape, K)
    Kp, Np = params.w_kt.shape
    tn, tk = params.tn, params.tk
    compute_dtype = params.w_kt.dtype
    out_dtype = out_dtype or x.dtype
    in_isz = jnp.dtype(compute_dtype).itemsize
    out_isz = jnp.dtype(out_dtype).itemsize

    tm, Mp = _choose_tile(M, _TM_CANDIDATES)
    # Shrink the M tile if the working set would exceed the cross-generation
    # VMEM budget (re-derived for v7x's 64 MiB physical VMEM).
    while (_vmem_bytes(tm, tn, tk, in_isz, out_isz) > _VMEM_BUDGET
           and tm > _TM_CANDIDATES[-1]):
        smaller = [t for t in _TM_CANDIDATES if t < tm]
        if not smaller:
            break
        tm = smaller[0]
        Mp = -(-M // tm) * tm

    x2 = x.reshape(M, K).astype(compute_dtype)
    if (Mp, Kp) != (M, K):
        # Zero-padded K contributes exactly 0 to the f32 accumulator.
        x2 = jnp.pad(x2, ((0, Mp - M), (0, Kp - K)))

    grid = (Mp // tm, Np // tn, Kp // tk)

    needed = _vmem_bytes(tm, tn, tk, in_isz, out_isz)
    vmem_limit = max(16 << 20, min(needed + (8 << 20), 56 << 20))

    # Advisory: actual streamed HBM traffic of this tiling (x is re-read once
    # per N tile, w once per M tile, output written once).
    cost = pl.CostEstimate(
        flops=int(2 * M * K * N),
        transcendentals=0,
        bytes_accessed=int(Mp * Kp * in_isz * (Np // tn)
                           + Kp * Np * in_isz * (Mp // tm)
                           + Mp * Np * out_isz
                           + Np * 4),
    )

    out = pl.pallas_call(
        _row_parallel_matmul_kernel,
        out_shape=jax.ShapeDtypeStruct((Mp, Np), out_dtype),
        grid_spec=pltpu.PrefetchScalarGridSpec(
            num_scalar_prefetch=0,
            grid=grid,
            in_specs=[
                pl.BlockSpec((tm, tk), lambda i, j, k: (i, k)),   # activations
                pl.BlockSpec((tk, tn), lambda i, j, k: (k, j)),   # pre-transposed weights
                pl.BlockSpec((1, tn), lambda i, j, k: (0, j)),    # summed bias (K-invariant)
            ],
            out_specs=pl.BlockSpec((tm, tn), lambda i, j, k: (i, j)),
            scratch_shapes=[pltpu.VMEM((tm, tn), jnp.float32)],
        ),
        compiler_params=pltpu.CompilerParams(
            dimension_semantics=("parallel", "parallel", "arbitrary"),
            vmem_limit_bytes=int(vmem_limit),
        ),
        cost_estimate=cost,
    )(x2, params.w_kt, params.b_sum)

    if (Mp, Np) != (M, N):
        out = out[:M, :N]
    return out.reshape(*lead, N)


def row_parallel_linear_from_shards(x, weights, biases, *,
                                    compute_dtype=jnp.bfloat16, out_dtype=None):
    """Convenience: prep + forward in one call. Prefer calling
    prepare_row_parallel_params() once per weight update and reusing it."""
    lead = x.shape[:-1]
    m_hint = math.prod(lead) if lead else 1
    params = prepare_row_parallel_params(weights, biases,
                                         compute_dtype=compute_dtype,
                                         m_hint=m_hint)
    return row_parallel_linear(x, params, out_dtype=out_dtype)


# ----------------------------- reference & test ------------------------------

def _reference(x, weights, biases, compute_dtype=jnp.float32):
    """Pure-JAX reference: per-rank linear + all-reduce sum (PyTorch forward).
    Inputs are rounded to compute_dtype first so the bf16 path is comparable."""
    P = weights.shape[0]
    xs = x.astype(compute_dtype).astype(jnp.float32)
    ws = weights.astype(compute_dtype).astype(jnp.float32)
    shards = jnp.split(xs, P, axis=-1)
    out = shards[0] @ ws[0].T + biases[0].astype(jnp.float32)
    for i in range(1, P):
        out = out + shards[i] @ ws[i].T + biases[i].astype(jnp.float32)
    return out


if __name__ == "__main__":
    key = jax.random.PRNGKey(0)
    k_x, k_w, k_x2, k_w2, k_b2 = jax.random.split(key, 5)

    # --- Case 1: module-consistent shapes, f32 path, hoisted-prep API -------
    model_parallel_size = 2
    in_features = 32
    out_features = 256
    batch, seq = 2, 8
    assert in_features % model_parallel_size == 0
    in_per = in_features // model_parallel_size     # = self.in_features per rank
    initializer_range = 0.02

    x = jax.random.normal(k_x, (batch, seq, in_features), dtype=jnp.float32)
    # weight ~ Normal(0, 0.02) per rank shard, bias = 0 (matches __init__)
    weights = initializer_range * jax.random.normal(
        k_w, (model_parallel_size, out_features, in_per), dtype=jnp.float32)
    biases = jnp.zeros((model_parallel_size, out_features), dtype=jnp.float32)

    params = prepare_row_parallel_params(          # one-time layout plumbing
        weights, biases, compute_dtype=jnp.float32, m_hint=batch * seq)
    y = jax.block_until_ready(row_parallel_linear(x, params))
    ref = _reference(x, weights, biases)
    assert y.shape == (batch, seq, out_features), y.shape
    assert jnp.allclose(y, ref, atol=1e-5, rtol=1e-5)

    # --- Case 2: nonzero bias, N tiling / padding, bf16 default path --------
    P2, in2, out2 = 3, 96, 384
    b2, s2 = 4, 25
    x_2 = jax.random.normal(k_x2, (b2, s2, in2), dtype=jnp.float32)
    w_2 = initializer_range * jax.random.normal(
        k_w2, (P2, out2, in2 // P2), dtype=jnp.float32)
    bias_2 = 0.1 * jax.random.normal(k_b2, (P2, out2), dtype=jnp.float32)

    y2 = jax.block_until_ready(
        row_parallel_linear_from_shards(x_2, w_2, bias_2))   # bf16 by default
    ref2 = _reference(x_2, w_2, bias_2, compute_dtype=jnp.bfloat16)
    assert y2.shape == (b2, s2, out2), y2.shape
    assert jnp.allclose(y2, ref2, atol=2e-3, rtol=2e-3)

    print("KERNEL_OK")
</pallas_src>

<mosaic_0001>
module attributes {stable_mosaic.version = 11 : i64} {
  func.func @_row_parallel_matmul_kernel(%arg0: i32, %arg1: i32, %arg2: i32, %arg3: memref<16x32xf32, #tpu.memory_space<vmem>>, %arg4: memref<32x128xf32, #tpu.memory_space<vmem>>, %arg5: memref<1x128xf32, #tpu.memory_space<vmem>>, %arg6: memref<16x128xf32, #tpu.memory_space<vmem>>, %arg7: memref<16x128xf32, #tpu.memory_space<vmem>>) attributes {dimension_semantics = [#tpu.dimension_semantics<parallel>, #tpu.dimension_semantics<parallel>, #tpu.dimension_semantics<arbitrary>], iteration_bounds = array<i64: 1, 2, 1>, scalar_prefetch = 0 : i64, scratch_operands = 1 : i64, tpu.core_type = #tpu.core_type<tc>, window_params = [{transform_indices = @transform_0, window_bounds = array<i64: 16, 32>}, {transform_indices = @transform_1, window_bounds = array<i64: 32, 128>}, {transform_indices = @transform_2, window_bounds = array<i64: 1, 128>}, {transform_indices = @transform_3, window_bounds = array<i64: 16, 128>}]} {
    %c0_i32 = arith.constant 0 : i32
    %0 = arith.cmpi eq, %arg2, %c0_i32 : i32
    %1 = arith.extui %0 : i1 to i32
    %c0_i32_0 = arith.constant 0 : i32
    %2 = arith.cmpi ne, %1, %c0_i32_0 : i32
    scf.if %2 {
      %cst_10 = arith.constant 0.000000e+00 : f32
      %12 = vector.broadcast %cst_10 : f32 to vector<16x128xf32>
      %c0_11 = arith.constant 0 : index
      %c0_12 = arith.constant 0 : index
      %13 = vector.load %arg7[%c0_11, %c0_12] : memref<16x128xf32, #tpu.memory_space<vmem>>, vector<16x128xf32>
      tpu.vector_store %arg7[%c0_11, %c0_12], %12 {strides = array<i32>} : memref<16x128xf32, #tpu.memory_space<vmem>>, vector<16x128xf32>,
    } else {
    }
    %c0 = arith.constant 0 : index
    %c0_1 = arith.constant 0 : index
    %3 = vector.load %arg7[%c0, %c0_1] : memref<16x128xf32, #tpu.memory_space<vmem>>, vector<16x128xf32>
    %c0_2 = arith.constant 0 : index
    %c0_3 = arith.constant 0 : index
    %4 = vector.load %arg3[%c0_2, %c0_3] : memref<16x32xf32, #tpu.memory_space<vmem>>, vector<16x32xf32>
    %c0_4 = arith.constant 0 : index
    %c0_5 = arith.constant 0 : index
    %5 = vector.load %arg4[%c0_4, %c0_5] : memref<32x128xf32, #tpu.memory_space<vmem>>, vector<32x128xf32>
    %cst = arith.constant dense<0.000000e+00> : vector<16x128xf32>
    %6 = tpu.matmul %4, %5, %cst {dimension_numbers = #tpu.dot_dimension_numbers<[1], [0], [0], [1], [0, 0, 1, 1], [], []>} : vector<16x32xf32>, vector<32x128xf32>, vector<16x128xf32> -> vector<16x128xf32>
    %7 = arith.addf %3, %6 : vector<16x128xf32>
    %c0_6 = arith.constant 0 : index
    %c0_7 = arith.constant 0 : index
    %8 = vector.load %arg7[%c0_6, %c0_7] : memref<16x128xf32, #tpu.memory_space<vmem>>, vector<16x128xf32>
    tpu.vector_store %arg7[%c0_6, %c0_7], %7 {strides = array<i32>} : memref<16x128xf32, #tpu.memory_space<vmem>>, vector<16x128xf32>,
    %c0_i32_8 = arith.constant 0 : i32
    %9 = arith.cmpi eq, %arg2, %c0_i32_8 : i32
    %10 = arith.extui %9 : i1 to i32
    %c0_i32_9 = arith.constant 0 : i32
    %11 = arith.cmpi ne, %10, %c0_i32_9 : i32
    scf.if %11 {
      %c0_10 = arith.constant 0 : index
      %c0_11 = arith.constant 0 : index
      %12 = vector.load %arg7[%c0_10, %c0_11] : memref<16x128xf32, #tpu.memory_space<vmem>>, vector<16x128xf32>
      %c0_12 = arith.constant 0 : index
      %c0_13 = arith.constant 0 : index
      %13 = vector.load %arg5[%c0_12, %c0_13] : memref<1x128xf32, #tpu.memory_space<vmem>>, vector<1x128xf32>
      %14 = vector.broadcast %13 : vector<1x128xf32> to vector<16x128xf32>
      %15 = arith.addf %12, %14 : vector<16x128xf32>
      %c0_14 = arith.constant 0 : index
      %c0_15 = arith.constant 0 : index
      %16 = vector.load %arg6[%c0_14, %c0_15] : memref<16x128xf32, #tpu.memory_space<vmem>>, vector<16x128xf32>
      tpu.vector_store %arg6[%c0_14, %c0_15], %15 {strides = array<i32>} : memref<16x128xf32, #tpu.memory_space<vmem>>, vector<16x128xf32>,
    } else {
    }
    return
  }
  func.func @transform_0(%arg0: i32, %arg1: i32, %arg2: i32) -> (i32, i32) {
    %c0_i32 = arith.constant 0 : i32
    return %arg0, %arg2 : i32, i32
  }
  func.func @transform_1(%arg0: i32, %arg1: i32, %arg2: i32) -> (i32, i32) {
    %c0_i32 = arith.constant 0 : i32
    return %arg2, %arg1 : i32, i32
  }
  func.func @transform_2(%arg0: i32, %arg1: i32, %arg2: i32) -> (i32, i32) {
    %c0_i32 = arith.constant 0 : i32
    %c0_i32_0 = arith.constant 0 : i32
    return %c0_i32, %arg1 : i32, i32
  }
  func.func @transform_3(%arg0: i32, %arg1: i32, %arg2: i32) -> (i32, i32) {
    %c0_i32 = arith.constant 0 : i32
    return %arg0, %arg1 : i32, i32
  }
}

</mosaic_0001>

<llo_original>
// kernel: tpu_custom_call.1
$region0: #{tpu_custom_call.1}
  #allocation0 [shape = 'u32[]', space=smem, size = 0x4, offset = 0x4, fixed_abs, tag = 'smem constant byte address 0x4 - core index']
  #allocation1 [shape = 'u32[72,128]{1,0:T(1,128)}', space=vmem, size = 0x9000, scoped, tag = 'internal scratch']
  #allocation2 [shape = 'f32[16,128]{1,0:T(8,128)}', space=vmem, size = 0x2000, scoped, tag = 'scratch operand']
  %s0 = inlined_call_operand.hbm [shape: f32[16,32], index: 0, kind: input, shape index: {}]
  %s1 = inlined_call_operand.hbm [shape: f32[32,256], index: 1, kind: input, shape index: {}]
  %s2 = inlined_call_operand.hbm [shape: f32[1,256], index: 2, kind: input, shape index: {}]
  %s3 = inlined_call_operand.hbm [shape: f32[16,256], index: 3, kind: output, shape index: {}]
  %s4 = sld [smem:[#allocation0]]
  $region65: #{tpu_custom_call.1} parent=0
    _
  %s6 = ssub.s32 1, %s4
  %s7 = scalar_select 0, %s6, %s4
  $region1: #{tpu_custom_call.1} parent=0
    #allocation3 [shape = 'u8[8192]{0}', space=vmem, size = 0x2000, scoped, tag = 'input window, operand 0, single buffered']
    #allocation4 [shape = 's32[2]{0}', space=sflag, size = 0x8, scoped, tag = 'scoped memory for tpu_custom_call.1']
    #allocation5 [shape = 's32[2]{0}', space=sflag, size = 0x8, scoped, tag = 'scoped memory for tpu_custom_call.1']
    #allocation6 [shape = 'u8[32768]{0}', space=vmem, size = 0x8000, scoped, tag = 'input window, operand 1']
    #allocation7 [shape = 's32[2]{0}', space=sflag, size = 0x8, scoped, tag = 'scoped memory for tpu_custom_call.1']
    #allocation8 [shape = 'u8[1024]{0}', space=vmem, size = 0x400, scoped, tag = 'input window, operand 2']
    #allocation9 [shape = 'u8[16384]{0}', space=vmem, size = 0x4000, scoped, tag = 'output window, operand 0']
    %8 = vsyncpa [#allocation4], 0
    %9 = vsyncpa [#allocation7], 0
    %s10 = scalar_lea.sflag [#allocation7], 1
    %11 = vsyncpa %s10, 0
    %12 = vsyncpa [#allocation5], 0
    %s13 = scalar_lea.sflag [#allocation5], 1
    %14 = vsyncpa %s13, 0
    loop: start=0, step=1, limit=4
    $region2: #{tpu_custom_call.1} parent=1 // loop_pre_header
      _
    $region3: #{tpu_custom_call.1} parent=1 // loop_header
      %s16 = sphi 0, %s20
      %p17 = scmp.ge.s32.totalorder %s16, 4
      %s23 = sphi 0, %s42
      %s24 = sphi 0, %s38
      %s25 = sphi 0, %s34
      %s26 = sphi 0, %s23
      %s27 = sphi 0, %s24
      %s28 = sphi 0, %s25
      %s29 = sphi 0, %s26
      %s30 = sphi 0, %s27
      %s31 = sphi 0, %s28
      %s47 = sphi 0, %s49
      %s50 = sphi 0, %s47
      %s51 = sphi 0, %s50
      %s67 = sphi 0, %s51
      %s75 = sphi 0, %s77
      %s78 = sphi 0, %s75
      %s79 = sphi 0, %s78
      %s95 = sphi 0, %s79
      %s101 = sphi 0, %s103
      %s104 = sphi 0, %s101
      %s105 = sphi 0, %s104
      %s121 = sphi 0, %s105
      %s129 = sphi 0, %s131
      %s132 = sphi 0, %s129
      %s133 = sphi 0, %s132
      %s149 = sphi 0, %s133
    $region4: #{tpu_custom_call.1} parent=1 // loop_header_branch
      %19 = sbr.rel (%p17) target = $region8
    $region5: #{tpu_custom_call.1} parent=1 // loop_body
      %s21 = ssub.s32 %s16, 1
      %s22 = ssub.s32 %s16, 2
      %s32 = sadd.s32 1, %s25
      %p33 = scmp.ge.s32.totalorder %s32, 1
      %s34 = scalar_select %p33, 0, %s32
      %s35 = sadd.s32 1, %s24
      %s36 = scalar_select %p33, %s35, %s24
      %p37 = scmp.ge.s32.totalorder %s36, 2
      %s38 = scalar_select %p37, 0, %s36
      %s39 = sadd.s32 1, %s23
      %s40 = scalar_select %p37, %s39, %s23
      %p41 = scmp.ge.s32.totalorder %s40, 1
      %s42 = scalar_select %p41, 0, %s40
      %s43 = ssub.s32 %s23, %s42
      %s44 = ssub.s32 %s25, %s34
      %s45 = sor.u32 %s43, %s44
      %p46 = scmp.eq.s32.totalorder %s45, 0
      %s48 = sadd.s32 %s47, 1
      %s49 = scalar_select %p46, %s47, %s48
      %p52 = pneg %p46
      %p53 = scmp.eq.s32.totalorder %s16, 1
      %p54 = por %p52, %p53
      %p55 = scmp.ne.s32.totalorder %s47, %s50
      %p56 = scmp.eq.s32.totalorder %s16, 0
      %p57 = por %p55, %p56
      %p58 = scmp.ne.s32.totalorder %s47, %s50
      %p59 = scmp.eq.s32.totalorder %s21, 1
      %p60 = por %p58, %p59
      %p61 = scmp.ne.s32.totalorder %s50, %s51
      %p62 = scmp.eq.s32.totalorder %s21, 0
      %p63 = por %p61, %p62
      %p64 = scmp.ne.s32.totalorder %s50, %s51
      %p65 = scmp.eq.s32.totalorder %s22, 1
      %p66 = por %p64, %p65
      %p68 = scmp.ne.s32.totalorder %s51, %s67
      %p69 = scmp.eq.s32.totalorder %s22, 0
      %p70 = por %p68, %p69
      %s71 = ssub.s32 %s25, %s34
      %s72 = ssub.s32 %s24, %s38
      %s73 = sor.u32 %s71, %s72
      %p74 = scmp.eq.s32.totalorder %s73, 0
      %s76 = sadd.s32 %s75, 1
      %s77 = scalar_select %p74, %s75, %s76
      %p80 = pneg %p74
      %p81 = scmp.eq.s32.totalorder %s16, 1
      %p82 = por %p80, %p81
      %p83 = scmp.ne.s32.totalorder %s75, %s78
      %p84 = scmp.eq.s32.totalorder %s16, 0
      %p85 = por %p83, %p84
      %p86 = scmp.ne.s32.totalorder %s75, %s78
      %p87 = scmp.eq.s32.totalorder %s21, 1
      %p88 = por %p86, %p87
      %p89 = scmp.ne.s32.totalorder %s78, %s79
      %p90 = scmp.eq.s32.totalorder %s21, 0
      %p91 = por %p89, %p90
      %p92 = scmp.ne.s32.totalorder %s78, %s79
      %p93 = scmp.eq.s32.totalorder %s22, 1
      %p94 = por %p92, %p93
      %p96 = scmp.ne.s32.totalorder %s79, %s95
      %p97 = scmp.eq.s32.totalorder %s22, 0
      %p98 = por %p96, %p97
      %s99 = ssub.s32 %s24, %s38
      %p100 = scmp.eq.s32.totalorder %s99, 0
      %s102 = sadd.s32 %s101, 1
      %s103 = scalar_select %p100, %s101, %s102
      %p106 = pneg %p100
      %p107 = scmp.eq.s32.totalorder %s16, 1
      %p108 = por %p106, %p107
      %p109 = scmp.ne.s32.totalorder %s101, %s104
      %p110 = scmp.eq.s32.totalorder %s16, 0
      %p111 = por %p109, %p110
      %p112 = scmp.ne.s32.totalorder %s101, %s104
      %p113 = scmp.eq.s32.totalorder %s21, 1
      %p114 = por %p112, %p113
      %p115 = scmp.ne.s32.totalorder %s104, %s105
      %p116 = scmp.eq.s32.totalorder %s21, 0
      %p117 = por %p115, %p116
      %p118 = scmp.ne.s32.totalorder %s104, %s105
      %p119 = scmp.eq.s32.totalorder %s22, 1
      %p120 = por %p118, %p119
      %p122 = scmp.ne.s32.totalorder %s105, %s121
      %p123 = scmp.eq.s32.totalorder %s22, 0
      %p124 = por %p122, %p123
      %s125 = ssub.s32 %s23, %s42
      %s126 = ssub.s32 %s24, %s38
      %s127 = sor.u32 %s125, %s126
      %p128 = scmp.eq.s32.totalorder %s127, 0
      %s130 = sadd.s32 %s129, 1
      %s131 = scalar_select %p128, %s129, %s130
      %p134 = pneg %p128
      %p135 = scmp.eq.s32.totalorder %s16, 1
      %p136 = por %p134, %p135
      %p137 = scmp.ne.s32.totalorder %s129, %s132
      %p138 = scmp.eq.s32.totalorder %s16, 0
      %p139 = por %p137, %p138
      %p140 = scmp.ne.s32.totalorder %s129, %s132
      %p141 = scmp.eq.s32.totalorder %s21, 1
      %p142 = por %p140, %p141
      %p143 = scmp.ne.s32.totalorder %s132, %s133
      %p144 = scmp.eq.s32.totalorder %s21, 0
      %p145 = por %p143, %p144
      %p146 = scmp.ne.s32.totalorder %s132, %s133
      %p147 = scmp.eq.s32.totalorder %s22, 1
      %p148 = por %p146, %p147
      %p150 = scmp.ne.s32.totalorder %s133, %s149
      %p151 = scmp.eq.s32.totalorder %s22, 0
      %p152 = por %p150, %p151
      %p153 = scmp.le.s32.totalorder 1, %s16
      %p154 = scmp.lt.s32.totalorder %s16, 3
      %p155 = pnand %p153, %p154
      %p156 = pneg %p155
      // Predicated region
      $region9: #{tpu_custom_call.1} parent=5 // pred_check
        _
      $region10: #{tpu_custom_call.1} parent=5 // pred_check_branch
        %158 = sbr.rel (%p155) target = $region12
      $region11: #{tpu_custom_call.1} parent=5 // pred_region
        %s159 = ssub.s32 %s16, 1
        // Predicated region
        $region13: #{tpu_custom_call.1} parent=11 // pred_check
          %p160 = pneg %p63
        $region14: #{tpu_custom_call.1} parent=11 // pred_check_branch
          %162 = sbr.rel (%p160) target = $region16
        $region15: #{tpu_custom_call.1} parent=11 // pred_region
          %s163 = smul.u32 2, %s26
          %165 = vsyncadd [#allocation4], 0
          %s166 = sadd.s32 %s28, %s163
          %s167 = smul.addr %s166, 8
          %s168 = scalar_lea.hbm %s0, %s167
          %s169 = sshll.u32 %s168, 4
          %s170 = int_to_ptr.hbm [resolvable:$true] %s169
          %s171 = sshll.u32 [#allocation3], 4
          %s172 = int_to_ptr.vmem [resolvable:$true] %s171
          %177 = dma.hbm_to_vmem [thread:$0]  %s170, 256, %s172, [#allocation4], 128, 128, 8
        $region16: #{tpu_custom_call.1} parent=11 // pred_fallthru
          _
      $region12: #{tpu_custom_call.1} parent=5 // pred_fallthru
        _
      %p178 = scmp.lt.s32.totalorder %s16, 2
      // Predicated region
      $region17: #{tpu_custom_call.1} parent=5 // pred_check
        %p179 = pneg %p178
      $region18: #{tpu_custom_call.1} parent=5 // pred_check_branch
        %181 = sbr.rel (%p179) target = $region20
      $region19: #{tpu_custom_call.1} parent=5 // pred_region
        // Predicated region
        $region21: #{tpu_custom_call.1} parent=19 // pred_check
          %p182 = pneg %p85
        $region22: #{tpu_custom_call.1} parent=19 // pred_check_branch
          %184 = sbr.rel (%p182) target = $region24
        $region23: #{tpu_custom_call.1} parent=19 // pred_region
          %s185 = sand.u32 %s16, 1
          %s186 = scalar_lea.sflag [#allocation7], %s185
          %s187 = sand.u32 %s75, 1
          %s188 = smul.addr %s187, 32
          %s189 = scalar_lea.vmem [#allocation6], %s188
          %s190 = smul.u32 4, %s25
          %192 = vsyncadd %s186, 0
          %s193 = smul.addr %s190, 2
          %s194 = sadd.s32 %s24, %s193
          %s195 = smul.addr %s194, 8
          %s196 = scalar_lea.hbm %s1, %s195
          %s197 = sshll.u32 %s196, 4
          %s198 = int_to_ptr.hbm [resolvable:$true] %s197
          %s199 = sshll.u32 %s189, 4
          %s200 = int_to_ptr.vmem [resolvable:$true] %s199
          %205 = dma.hbm_to_vmem [thread:$0]  %s198, 512, %s200, %s186, 256, 128, 8
        $region24: #{tpu_custom_call.1} parent=19 // pred_fallthru
          _
        // Predicated region
        $region25: #{tpu_custom_call.1} parent=19 // pred_check
          %p206 = pneg %p111
        $region26: #{tpu_custom_call.1} parent=19 // pred_check_branch
          %208 = sbr.rel (%p206) target = $region28
        $region27: #{tpu_custom_call.1} parent=19 // pred_region
          %s209 = sand.u32 %s16, 1
          %s210 = scalar_lea.sflag [#allocation7], %s209
          %s211 = sand.u32 %s101, 1
          %s212 = scalar_lea.vmem [#allocation8], %s211
          %214 = vsyncadd %s210, 0
          %s215 = scalar_lea.hbm %s2, %s24
          %s217 = sshll.u32 %s215, 4
          %s218 = int_to_ptr.hbm [resolvable:$true] %s217
          %s219 = sshll.u32 %s212, 4
          %s220 = int_to_ptr.vmem [resolvable:$true] %s219
          %222 = dma.hbm_to_vmem [thread:$0]  %s218, 16, %s220, %s210
        $region28: #{tpu_custom_call.1} parent=19 // pred_fallthru
          _
      $region20: #{tpu_custom_call.1} parent=5 // pred_fallthru
        _
      %p223 = scmp.le.s32.totalorder 1, %s16
      %p224 = scmp.lt.s32.totalorder %s16, 3
      %p225 = pnand %p223, %p224
      %p226 = pneg %p225
      // Predicated region
      $region29: #{tpu_custom_call.1} parent=5 // pred_check
        _
      $region30: #{tpu_custom_call.1} parent=5 // pred_check_branch
        %228 = sbr.rel (%p225) target = $region32
      $region31: #{tpu_custom_call.1} parent=5 // pred_region
        %s229 = ssub.s32 %s16, 1
        // Predicated region
        $region33: #{tpu_custom_call.1} parent=31 // pred_check
          %p230 = pneg %p63
        $region34: #{tpu_custom_call.1} parent=31 // pred_check_branch
          %232 = sbr.rel (%p230) target = $region36
        $region35: #{tpu_custom_call.1} parent=31 // pred_region
          %234 = dma.done [#allocation4], 256
        $region36: #{tpu_custom_call.1} parent=31 // pred_fallthru
          _
        %s235 = sand.u32 %s21, 1
        %s236 = scalar_lea.sflag [#allocation7], %s235
        %s237 = sand.u32 %s78, 1
        %s238 = smul.addr %s237, 32
        %s239 = scalar_lea.vmem [#allocation6], %s238
        // Predicated region
        $region37: #{tpu_custom_call.1} parent=31 // pred_check
          %p240 = pneg %p91
        $region38: #{tpu_custom_call.1} parent=31 // pred_check_branch
          %242 = sbr.rel (%p240) target = $region40
        $region39: #{tpu_custom_call.1} parent=31 // pred_region
          %244 = dma.done %s236, 512
        $region40: #{tpu_custom_call.1} parent=31 // pred_fallthru
          _
        %s245 = sand.u32 %s21, 1
        %s246 = scalar_lea.sflag [#allocation7], %s245
        %s247 = sand.u32 %s104, 1
        %s248 = scalar_lea.vmem [#allocation8], %s247
        // Predicated region
        $region41: #{tpu_custom_call.1} parent=31 // pred_check
          %p249 = pneg %p117
        $region42: #{tpu_custom_call.1} parent=31 // pred_check_branch
          %251 = sbr.rel (%p249) target = $region44
        $region43: #{tpu_custom_call.1} parent=31 // pred_region
          %253 = dma.done %s246, 16
        $region44: #{tpu_custom_call.1} parent=31 // pred_fallthru
          _
        %p254 = pneg %p63
        %p255 = pneg %p60
        %s256 = sand.u32 %s21, 1
        %s257 = scalar_lea.sflag [#allocation7], %s256
        %s258 = sand.u32 %s78, 1
        %s259 = smul.addr %s258, 32
        %s260 = scalar_lea.vmem [#allocation6], %s259
        %p261 = pneg %p91
        %p262 = pneg %p88
        %s263 = sand.u32 %s21, 1
        %s264 = scalar_lea.sflag [#allocation7], %s263
        %s265 = sand.u32 %s104, 1
        %s266 = scalar_lea.vmem [#allocation8], %s265
        %p267 = pneg %p117
        %p268 = pneg %p114
        %p269 = pneg %p145
        %p270 = pneg %p142
        %s271 = sand.u32 %s132, 1
        %s272 = scalar_lea.sflag [#allocation5], %s271
        %s273 = sand.u32 %s132, 1
        %s274 = smul.addr %s273, 16
        %s275 = scalar_lea.vmem [#allocation9], %s274
        %s276 = smul.u32 2, %s26
        %s277 = smul.u32 4, %s28
        %s278 = smul.u32 2, %s26
        %p279 = scmp.eq.s32.totalorder %s28, 0
        // Predicated region
        $region45: #{tpu_custom_call.1} parent=31 // pred_check
          %p280 = pneg %p279
        $region46: #{tpu_custom_call.1} parent=31 // pred_check_branch
          %282 = sbr.rel (%p280) target = $region48
        $region47: #{tpu_custom_call.1} parent=31 // pred_region
          %283 = vst [vmem:[#allocation2] sm:$0xff] 0.0
          %284 = vst [vmem:[#allocation2 + $0x8] sm:$0xff] 0.0
        $region48: #{tpu_custom_call.1} parent=31 // pred_fallthru
          _
        %v285 = vld [vmem:[#allocation2] sm:$0xff]
        %v286 = vld [vmem:[#allocation2 + $0x8] sm:$0xff]
        %v287 = vld [vmem:[#allocation3] sm:$0xff]
        %v288 = vld [vmem:[#allocation3 + $0x8] sm:$0xff]
        %v289 = vld [vmem:[%s239] sm:$0xff]
        %v290 = vld [vmem:[%s239 + $0x8] sm:$0xff]
        %v291 = vld [vmem:[%s239 + $0x10] sm:$0xff]
        %v292 = vld [vmem:[%s239 + $0x18] sm:$0xff]
        %vm293 = vcmask 261120
        %v295 = vsel %vm293, %v287, 0
        %v298 = vsel %vm293, %v288, 0
        %300 = vmatpush.msra.mxu0 0.0
        %301 = vmatpush.msra.mxu0 0.0
        %302 = vmatpush.msra.mxu0 0.0
        %303 = vmatpush.msra.mxu0 0.0
        %304 = vmatpush.msra.mxu0 0.0
        %305 = vmatpush.msra.mxu0 0.0
        %306 = vmatpush.msra.mxu0 0.0
        %307 = vmatpush.msra.mxu0 0.0
        %308 = vmatpush.msra.mxu0 0.0
        %309 = vmatpush.msra.mxu0 0.0
        %310 = vmatpush.msra.mxu0 0.0
        %311 = vmatpush.msra.mxu0 0.0
        %312 = vmatpush.msra.mxu0 %v292
        %313 = vmatpush.msra.mxu0 %v291
        %314 = vmatpush.msra.mxu0 %v290
        %315 = vmatpush.msra.mxu0 %v289
        %316 = vmatmul.f32.gmra.mxu0 %v295
        %v317 = vpop.f32.mrf.mxu0
        %v318 = vadd.f32 0.0, %v317
        %319 = vmatmul.f32.gmra.mxu0 %v298
        %v320 = vpop.f32.mrf.mxu0
        %v321 = vadd.f32 0.0, %v320
        %322 = vdwg.mxu0
        %v323 = vadd.f32 %v285, %v318
        %v324 = vadd.f32 %v286, %v321
        %325 = vst [vmem:[#allocation2] sm:$0xff] %v323
        %326 = vst [vmem:[#allocation2 + $0x8] sm:$0xff] %v324
        // Predicated region
        $region49: #{tpu_custom_call.1} parent=31 // pred_check
          %p327 = pneg %p279
        $region50: #{tpu_custom_call.1} parent=31 // pred_check_branch
          %329 = sbr.rel (%p327) target = $region52
        $region51: #{tpu_custom_call.1} parent=31 // pred_region
          %v330 = vld [vmem:[#allocation2] sm:$0xff]
          %v331 = vld [vmem:[#allocation2 + $0x8] sm:$0xff]
          %v332 = vld [vmem:[%s248] sm:$0x1]
          %v334 = vperm.slane %v332, 0
          %v336 = vadd.f32 %v330, %v334
          %v337 = vadd.f32 %v331, %v334
          %338 = vst [vmem:[%s275] sm:$0xff] %v336
          %339 = vst [vmem:[%s275 + $0x8] sm:$0xff] %v337
        $region52: #{tpu_custom_call.1} parent=31 // pred_fallthru
          _
        %s340 = sand.u32 %s132, 1
        %s341 = scalar_lea.sflag [#allocation5], %s340
        %s342 = sand.u32 %s132, 1
        %s343 = smul.addr %s342, 16
        %s344 = scalar_lea.vmem [#allocation9], %s343
        // Predicated region
        $region53: #{tpu_custom_call.1} parent=31 // pred_check
          %p345 = pneg %p142
        $region54: #{tpu_custom_call.1} parent=31 // pred_check_branch
          %347 = sbr.rel (%p345) target = $region56
        $region55: #{tpu_custom_call.1} parent=31 // pred_region
          %s348 = smul.u32 2, %s26
          %350 = vsyncadd %s341, 0
          %s351 = smul.addr %s348, 2
          %s352 = sadd.s32 %s27, %s351
          %s353 = smul.addr %s352, 8
          %s354 = scalar_lea.hbm %s3, %s353
          %s355 = sshll.u32 %s344, 4
          %s356 = int_to_ptr.vmem [resolvable:$true] %s355
          %s357 = sshll.u32 %s354, 4
          %s358 = int_to_ptr.hbm [resolvable:$true] %s357
          %363 = dma.vmem_to_hbm [thread:$0]  %s356, 256, %s358, %s341, 128, 256, 8
        $region56: #{tpu_custom_call.1} parent=31 // pred_fallthru
          _
      $region32: #{tpu_custom_call.1} parent=5 // pred_fallthru
        _
      %p364 = scmp.le.s32.totalorder 2, %s16
      // Predicated region
      $region57: #{tpu_custom_call.1} parent=5 // pred_check
        %p365 = pneg %p364
      $region58: #{tpu_custom_call.1} parent=5 // pred_check_branch
        %367 = sbr.rel (%p365) target = $region60
      $region59: #{tpu_custom_call.1} parent=5 // pred_region
        %s368 = ssub.s32 %s16, 2
        // Predicated region
        $region61: #{tpu_custom_call.1} parent=59 // pred_check
          %p369 = pneg %p148
        $region62: #{tpu_custom_call.1} parent=59 // pred_check_branch
          %371 = sbr.rel (%p369) target = $region64
        $region63: #{tpu_custom_call.1} parent=59 // pred_region
          %s372 = sand.u32 %s133, 1
          %s373 = scalar_lea.sflag [#allocation5], %s372
          %s374 = sand.u32 %s133, 1
          %s375 = smul.addr %s374, 16
          %s376 = scalar_lea.vmem [#allocation9], %s375
          %378 = dma.done %s373, 256
        $region64: #{tpu_custom_call.1} parent=59 // pred_fallthru
          _
      $region60: #{tpu_custom_call.1} parent=5 // pred_fallthru
        _
    $region6: #{tpu_custom_call.1} parent=1 // loop_footer
      %s20 = sadd.s32 1, %s16
    $region7: #{tpu_custom_call.1} parent=1 // loop_footer_branch
      %15 = sbr.rel target = $region3
    $region8: #{tpu_custom_call.1} parent=1 // loop_exit
      _
    %379 = vsyncpa [#allocation4], 1
    %s380 = scalar_lea.sflag [#allocation4], 1
    %381 = vsyncpa %s380, 1
    %382 = vsyncpa [#allocation7], 1
    %s383 = scalar_lea.sflag [#allocation7], 1
    %384 = vsyncpa %s383, 1
    %385 = vsyncpa [#allocation5], 1
    %s386 = scalar_lea.sflag [#allocation5], 1
    %387 = vsyncpa %s386, 1

</llo_original>
